<compile_context>
chip_gen: v6e
topology: v6e:2x2x1
jax: 0.10.0
libtpu: 0.0.40
codegen_flags: <defaults>
</compile_context>

<pallas_src>
import functools

import jax
import jax.numpy as jnp
from jax.experimental import pallas as pl
from jax.experimental.pallas import tpu as pltpu

MARGIN = 0.2
GAMMA = 5.0

_SUB = 8                 # sublane height of the online accumulators (one f32 vreg tall)
_NEG_BIG = -1e30         # post-gamma score padding; MUST stay finite (see m_acc=-inf init)
_DEFAULT_TILE_M = 512    # lanes per M tile (multiple of 128)


def _round_up(x, k):
    return ((x + k - 1) // k) * k


def _vmem_budget_bytes():
    """Chip-aware scoped-VMEM limit: ~96 MiB on v5e/v6e (128 MiB physical), 48 MiB on v7x."""
    phys = None
    try:
        phys = int(pltpu.get_tpu_info().vmem_capacity_bytes)
    except Exception:
        phys = None
    if phys is None:
        try:
            kind = jax.devices()[0].device_kind.lower()
            phys = 64 * 1024 * 1024 if "v7" in kind else 128 * 1024 * 1024
        except Exception:
            phys = 64 * 1024 * 1024
    if phys >= 96 * 1024 * 1024:
        return 96 * 1024 * 1024
    return 48 * 1024 * 1024


def _choose_tile_n(n, tile_m, score_bytes, vmem_limit):
    # Per-step VMEM per row of the tile:
    #   2 pipeline buffers x (score + int8 label)  +  ~3 full-tile f32 temporaries
    # 3 x (8, tile_m) f32 accumulators are negligible.  Keep ~40% headroom for the compiler.
    budget = int(vmem_limit * 0.60)
    per_row = tile_m * (2 * (score_bytes + 1) + 3 * 4)
    rows = max(32, (budget // per_row) // 32 * 32)
    n32 = _round_up(n, 32)
    return min(rows, n32)


def _contrastive_loss_kernel(score_ref, label_ref, lse_ref, simcol_ref,
                             m_acc, l_acc, pos_acc, *, gamma):
    step = pl.program_id(1)          # N (reduction) axis -- last grid axis
    nsteps = pl.num_programs(1)

    @pl.when(step == 0)
    def _init():
        # -inf init is safe ONLY because the score padding is finite (_NEG_BIG post-gamma):
        # the first-step rescale becomes exp(-inf - finite) == 0, never NaN.
        m_acc[...] = jnp.full_like(m_acc, -jnp.inf)
        l_acc[...] = jnp.zeros_like(l_acc)
        pos_acc[...] = jnp.zeros_like(pos_acc)

    s = score_ref[...].astype(jnp.float32) * gamma    # [TILE_N, TILE_M] f32
    lab = label_ref[...].astype(jnp.float32)          # int8 {0,1} -> f32
    pos = s * lab                                     # positives (label assumed {0,1})
    neg = s - pos                                     # == s * (1 - lab); zeros at positives

    tile_n, tile_m = s.shape
    groups = tile_n // _SUB
    # Layout-preserving split of the sublane axis into (groups, 8): reductions over
    # the leading axis are elementwise across vregs (no XLU in the steady state).
    neg3 = neg.reshape(groups, _SUB, tile_m)
    pos3 = pos.reshape(groups, _SUB, tile_m)

    blk_max = jnp.max(neg3, axis=0)                   # [8, TILE_M]
    new_m = jnp.maximum(m_acc[...], blk_max)
    l_acc[...] = (l_acc[...] * jnp.exp(m_acc[...] - new_m)
                  + jnp.sum(jnp.exp(neg3 - new_m), axis=0))
    m_acc[...] = new_m
    pos_acc[...] = pos_acc[...] + jnp.sum(pos3, axis=0)

    @pl.when(step == nsteps - 1)
    def _finalize():
        # One cross-sublane (XLU) collapse per M tile.
        m_fin = jnp.max(m_acc[...], axis=0, keepdims=True)                 # [1, TILE_M]
        l_fin = jnp.sum(l_acc[...] * jnp.exp(m_acc[...] - m_fin),
                        axis=0, keepdims=True)                             # [1, TILE_M]
        lse_ref[...] = m_fin + jnp.log(l_fin)                              # per-column lse
        simcol_ref[...] = jnp.sum(pos_acc[...], axis=0, keepdims=True)     # per-column sim part


def contrastive_loss(score, label, margin=MARGIN, gamma=GAMMA, tile_n=None, tile_m=None):
    """score: [N, M] float32/bfloat16, label: [N, M] {0,1} (ideally int8/bool).

    Returns scalar f32 loss matching the PyTorch ContrastiveLoss forward.
    """
    n, m = score.shape
    # Keep bf16 scores as-is (halves the dominant HBM stream on v5e/v6e); otherwise use f32.
    if score.dtype not in (jnp.bfloat16, jnp.float32):
        score = score.astype(jnp.float32)
    if label.dtype != jnp.int8:
        label = label.astype(jnp.int8)   # assumes label values are {0,1} / bool

    vmem_limit = _vmem_budget_bytes()
    score_bytes = jnp.dtype(score.dtype).itemsize

    # --- M (lane) tiling: parallel grid axis (megacore on v7x). ---
    m128 = _round_up(m, 128)
    if tile_m is None:
        tile_m = min(m128, _DEFAULT_TILE_M)
    tile_m = min(m128, max(128, _round_up(tile_m, 128)))
    m_pad = _round_up(m, tile_m)

    # --- N (sublane) tiling: pipelined reduction axis. ---
    if tile_n is None:
        tile_n = _choose_tile_n(n, tile_m, score_bytes, vmem_limit)
    tile_n = max(32, (tile_n // 32) * 32)   # int8-friendly sublane multiple
    n_pad = _round_up(n, tile_n)

    # Score padding is pre-scaled by 1/gamma so the post-gamma pad is exactly _NEG_BIG
    # (finite) for any gamma != 0: exp contributions vanish and no -inf - -inf NaNs.
    pad_val = _NEG_BIG / gamma if gamma != 0 else _NEG_BIG
    if m_pad != m or n_pad != n:
        score = jnp.pad(score, ((0, n_pad - n), (0, m_pad - m)), constant_values=pad_val)
        label = jnp.pad(label, ((0, n_pad - n), (0, m_pad - m)), constant_values=0)

    num_m_tiles = m_pad // tile_m
    steps = n_pad // tile_n

    kernel = functools.partial(_contrastive_loss_kernel, gamma=gamma)
    lse_cols, pos_cols = pl.pallas_call(
        kernel,
        out_shape=(
            jax.ShapeDtypeStruct((1, m_pad), jnp.float32),   # per-column logsumexp
            jax.ShapeDtypeStruct((1, m_pad), jnp.float32),   # per-column sum of positives
        ),
        grid=(num_m_tiles, steps),
        in_specs=[
            pl.BlockSpec((tile_n, tile_m), lambda j, i: (i, j)),   # score (f32 or bf16)
            pl.BlockSpec((tile_n, tile_m), lambda j, i: (i, j)),   # label int8
        ],
        out_specs=(
            pl.BlockSpec((1, tile_m), lambda j, i: (0, j)),
            pl.BlockSpec((1, tile_m), lambda j, i: (0, j)),
        ),
        scratch_shapes=[
            pltpu.VMEM((_SUB, tile_m), jnp.float32),   # running max
            pltpu.VMEM((_SUB, tile_m), jnp.float32),   # running sum-exp
            pltpu.VMEM((_SUB, tile_m), jnp.float32),   # running sum of positives
        ],
        compiler_params=pltpu.CompilerParams(
            # M tiles are independent (megacore-parallel on v7x); N carries the accumulators.
            dimension_semantics=("parallel", "arbitrary"),
            vmem_limit_bytes=vmem_limit,
        ),
        cost_estimate=pl.CostEstimate(
            flops=7 * n_pad * m_pad,
            transcendentals=n_pad * m_pad,
            bytes_accessed=n_pad * m_pad * (score_bytes + 1) + 2 * m_pad * 4,
        ),
    )(score, label)

    # Tiny jnp epilogue: combine per-M-tile partials.  Slicing to the first m real columns
    # makes padded-column values irrelevant to the loss.
    sim = jnp.sum(pos_cols[0, :m])
    loss = jnp.sum(jnp.maximum(lse_cols[0, :m] - sim + margin, 0.0))
    return loss


def contrastive_loss_ref(score, label, margin=MARGIN, gamma=GAMMA):
    s = score.astype(jnp.float32) * gamma
    lab = label.astype(jnp.float32)
    sim = jnp.sum(s * lab)
    neg = s * (1.0 - lab)
    lse = jax.scipy.special.logsumexp(neg, axis=0)
    return jnp.sum(jnp.maximum(lse - sim + margin, 0.0))


if __name__ == "__main__":
    key = jax.random.PRNGKey(0)
    k1, k2, k3, k4 = jax.random.split(key, 4)

    # Multi-tile in both axes: 4 pipelined N steps x 3 parallel M tiles.
    N, M = 256, 384
    score = jax.random.normal(k1, (N, M), dtype=jnp.float32)
    label = (jax.random.uniform(k2, (N, M)) > 0.9).astype(jnp.int8)
    loss = contrastive_loss(score, label, tile_n=64, tile_m=128)
    jax.block_until_ready(loss)
    ref = contrastive_loss_ref(score, label)
    assert jnp.allclose(loss, ref, rtol=1e-5, atol=1e-3), (loss, ref)

    # Auto tile sizes (chip-aware VMEM budget; single step / single M tile here).
    loss2 = contrastive_loss(score, label)
    jax.block_until_ready(loss2)
    assert jnp.allclose(loss2, ref, rtol=1e-5, atol=1e-3), (loss2, ref)

    # Non-aligned shape: exercises the N and M padding paths (and pad/gamma interaction).
    N2, M2 = 100, 200
    score2 = jax.random.normal(k3, (N2, M2), dtype=jnp.float32)
    label2 = (jax.random.uniform(k4, (N2, M2)) > 0.85).astype(jnp.int8)
    loss3 = contrastive_loss(score2, label2, tile_n=32, tile_m=128)
    jax.block_until_ready(loss3)
    ref3 = contrastive_loss_ref(score2, label2)
    assert jnp.allclose(loss3, ref3, rtol=1e-5, atol=1e-3), (loss3, ref3)

    # bf16 score path (lower HBM traffic on v5e/v6e); f32 accumulation inside the kernel.
    score_bf16 = score.astype(jnp.bfloat16)
    loss4 = contrastive_loss(score_bf16, label, tile_n=64, tile_m=128)
    jax.block_until_ready(loss4)
    ref4 = contrastive_loss_ref(score_bf16, label)
    assert jnp.allclose(loss4, ref4, rtol=1e-3, atol=1e-1), (loss4, ref4)

    print("KERNEL_OK")
</pallas_src>

<mosaic_0001>
module attributes {stable_mosaic.version = 11 : i64} {
  func.func @_contrastive_loss_kernel(%arg0: i32, %arg1: i32, %arg2: memref<64x128xf32, #tpu.memory_space<vmem>>, %arg3: memref<64x128xi8, #tpu.memory_space<vmem>>, %arg4: memref<1x128xf32, #tpu.memory_space<vmem>>, %arg5: memref<1x128xf32, #tpu.memory_space<vmem>>, %arg6: memref<8x128xf32, #tpu.memory_space<vmem>>, %arg7: memref<8x128xf32, #tpu.memory_space<vmem>>, %arg8: memref<8x128xf32, #tpu.memory_space<vmem>>) attributes {dimension_semantics = [#tpu.dimension_semantics<parallel>, #tpu.dimension_semantics<arbitrary>], iteration_bounds = array<i64: 3, 4>, scalar_prefetch = 0 : i64, scratch_operands = 3 : i64, tpu.core_type = #tpu.core_type<tc>, window_params = [{transform_indices = @transform_0, window_bounds = array<i64: 64, 128>}, {transform_indices = @transform_1, window_bounds = array<i64: 64, 128>}, {transform_indices = @transform_2, window_bounds = array<i64: 1, 128>}, {transform_indices = @transform_3, window_bounds = array<i64: 1, 128>}]} {
    %c0_i32 = arith.constant 0 : i32
    %0 = arith.cmpi eq, %arg1, %c0_i32 : i32
    %1 = arith.extui %0 : i1 to i32
    %c0_i32_0 = arith.constant 0 : i32
    %2 = arith.cmpi ne, %1, %c0_i32_0 : i32
    scf.if %2 {
      %cst_22 = arith.constant 0xFF800000 : f32
      %35 = vector.broadcast %cst_22 : f32 to vector<8x128xf32>
      %c0_23 = arith.constant 0 : index
      %c0_24 = arith.constant 0 : index
      %36 = vector.load %arg6[%c0_23, %c0_24] : memref<8x128xf32, #tpu.memory_space<vmem>>, vector<8x128xf32>
      tpu.vector_store %arg6[%c0_23, %c0_24], %35 {strides = array<i32>} : memref<8x128xf32, #tpu.memory_space<vmem>>, vector<8x128xf32>,
      %cst_25 = arith.constant 0.000000e+00 : f32
      %37 = vector.broadcast %cst_25 : f32 to vector<8x128xf32>
      %c0_26 = arith.constant 0 : index
      %c0_27 = arith.constant 0 : index
      %38 = vector.load %arg7[%c0_26, %c0_27] : memref<8x128xf32, #tpu.memory_space<vmem>>, vector<8x128xf32>
      tpu.vector_store %arg7[%c0_26, %c0_27], %37 {strides = array<i32>} : memref<8x128xf32, #tpu.memory_space<vmem>>, vector<8x128xf32>,
      %cst_28 = arith.constant 0.000000e+00 : f32
      %39 = vector.broadcast %cst_28 : f32 to vector<8x128xf32>
      %c0_29 = arith.constant 0 : index
      %c0_30 = arith.constant 0 : index
      %40 = vector.load %arg8[%c0_29, %c0_30] : memref<8x128xf32, #tpu.memory_space<vmem>>, vector<8x128xf32>
      tpu.vector_store %arg8[%c0_29, %c0_30], %39 {strides = array<i32>} : memref<8x128xf32, #tpu.memory_space<vmem>>, vector<8x128xf32>,
    } else {
    }
    %c0 = arith.constant 0 : index
    %c0_1 = arith.constant 0 : index
    %3 = vector.load %arg2[%c0, %c0_1] : memref<64x128xf32, #tpu.memory_space<vmem>>, vector<64x128xf32>
    %cst = arith.constant 5.000000e+00 : f32
    %4 = vector.broadcast %cst : f32 to vector<64x128xf32>
    %5 = arith.mulf %3, %4 : vector<64x128xf32>
    %c0_2 = arith.constant 0 : index
    %c0_3 = arith.constant 0 : index
    %6 = vector.load %arg3[%c0_2, %c0_3] : memref<64x128xi8, #tpu.memory_space<vmem>>, vector<64x128xi8>
    %7 = arith.sitofp %6 : vector<64x128xi8> to vector<64x128xf32>
    %8 = arith.mulf %5, %7 : vector<64x128xf32>
    %9 = arith.subf %5, %8 : vector<64x128xf32>
    %10 = vector.shape_cast %9 : vector<64x128xf32> to vector<8x8x128xf32>
    %11 = vector.shape_cast %8 : vector<64x128xf32> to vector<8x8x128xf32>
    %cst_4 = arith.constant dense<0xFF800000> : vector<8x128xf32>
    %12 = vector.multi_reduction <maximumf>, %10, %cst_4 [0] : vector<8x8x128xf32> to vector<8x128xf32>
    %c0_5 = arith.constant 0 : index
    %c0_6 = arith.constant 0 : index
    %13 = vector.load %arg6[%c0_5, %c0_6] : memref<8x128xf32, #tpu.memory_space<vmem>>, vector<8x128xf32>
    %14 = arith.maximumf %13, %12 : vector<8x128xf32>
    %c0_7 = arith.constant 0 : index
    %c0_8 = arith.constant 0 : index
    %15 = vector.load %arg7[%c0_7, %c0_8] : memref<8x128xf32, #tpu.memory_space<vmem>>, vector<8x128xf32>
    %c0_9 = arith.constant 0 : index
    %c0_10 = arith.constant 0 : index
    %16 = vector.load %arg6[%c0_9, %c0_10] : memref<8x128xf32, #tpu.memory_space<vmem>>, vector<8x128xf32>
    %17 = arith.subf %16, %14 : vector<8x128xf32>
    %18 = math.exp %17 : vector<8x128xf32>
    %19 = arith.mulf %15, %18 : vector<8x128xf32>
    %20 = vector.shape_cast %14 : vector<8x128xf32> to vector<1x8x128xf32>
    %21 = vector.broadcast %20 : vector<1x8x128xf32> to vector<8x8x128xf32>
    %22 = arith.subf %10, %21 : vector<8x8x128xf32>
    %23 = math.exp %22 : vector<8x8x128xf32>
    %cst_11 = arith.constant dense<0.000000e+00> : vector<8x128xf32>
    %24 = vector.multi_reduction <add>, %23, %cst_11 [0] : vector<8x8x128xf32> to vector<8x128xf32>
    %25 = arith.addf %19, %24 : vector<8x128xf32>
    %c0_12 = arith.constant 0 : index
    %c0_13 = arith.constant 0 : index
    %26 = vector.load %arg7[%c0_12, %c0_13] : memref<8x128xf32, #tpu.memory_space<vmem>>, vector<8x128xf32>
    tpu.vector_store %arg7[%c0_12, %c0_13], %25 {strides = array<i32>} : memref<8x128xf32, #tpu.memory_space<vmem>>, vector<8x128xf32>,
    %c0_14 = arith.constant 0 : index
    %c0_15 = arith.constant 0 : index
    %27 = vector.load %arg6[%c0_14, %c0_15] : memref<8x128xf32, #tpu.memory_space<vmem>>, vector<8x128xf32>
    tpu.vector_store %arg6[%c0_14, %c0_15], %14 {strides = array<i32>} : memref<8x128xf32, #tpu.memory_space<vmem>>, vector<8x128xf32>,
    %c0_16 = arith.constant 0 : index
    %c0_17 = arith.constant 0 : index
    %28 = vector.load %arg8[%c0_16, %c0_17] : memref<8x128xf32, #tpu.memory_space<vmem>>, vector<8x128xf32>
    %cst_18 = arith.constant dense<0.000000e+00> : vector<8x128xf32>
    %29 = vector.multi_reduction <add>, %11, %cst_18 [0] : vector<8x8x128xf32> to vector<8x128xf32>
    %30 = arith.addf %28, %29 : vector<8x128xf32>
    %c0_19 = arith.constant 0 : index
    %c0_20 = arith.constant 0 : index
    %31 = vector.load %arg8[%c0_19, %c0_20] : memref<8x128xf32, #tpu.memory_space<vmem>>, vector<8x128xf32>
    tpu.vector_store %arg8[%c0_19, %c0_20], %30 {strides = array<i32>} : memref<8x128xf32, #tpu.memory_space<vmem>>, vector<8x128xf32>,
    %c3_i32 = arith.constant 3 : i32
    %32 = arith.cmpi eq, %arg1, %c3_i32 : i32
    %33 = arith.extui %32 : i1 to i32
    %c0_i32_21 = arith.constant 0 : i32
    %34 = arith.cmpi ne, %33, %c0_i32_21 : i32
    scf.if %34 {
      %c0_22 = arith.constant 0 : index
      %c0_23 = arith.constant 0 : index
      %35 = vector.load %arg6[%c0_22, %c0_23] : memref<8x128xf32, #tpu.memory_space<vmem>>, vector<8x128xf32>
      %cst_24 = arith.constant dense<0xFF800000> : vector<128xf32>
      %36 = vector.multi_reduction <maximumf>, %35, %cst_24 [0] : vector<8x128xf32> to vector<128xf32>
      %37 = vector.shape_cast %36 : vector<128xf32> to vector<1x128xf32>
      %c0_25 = arith.constant 0 : index
      %c0_26 = arith.constant 0 : index
      %38 = vector.load %arg7[%c0_25, %c0_26] : memref<8x128xf32, #tpu.memory_space<vmem>>, vector<8x128xf32>
      %c0_27 = arith.constant 0 : index
      %c0_28 = arith.constant 0 : index
      %39 = vector.load %arg6[%c0_27, %c0_28] : memref<8x128xf32, #tpu.memory_space<vmem>>, vector<8x128xf32>
      %40 = vector.broadcast %37 : vector<1x128xf32> to vector<8x128xf32>
      %41 = arith.subf %39, %40 : vector<8x128xf32>
      %42 = math.exp %41 : vector<8x128xf32>
      %43 = arith.mulf %38, %42 : vector<8x128xf32>
      %cst_29 = arith.constant dense<0.000000e+00> : vector<128xf32>
      %44 = vector.multi_reduction <add>, %43, %cst_29 [0] : vector<8x128xf32> to vector<128xf32>
      %45 = vector.shape_cast %44 : vector<128xf32> to vector<1x128xf32>
      %46 = math.log %45 : vector<1x128xf32>
      %47 = arith.addf %37, %46 : vector<1x128xf32>
      %c0_30 = arith.constant 0 : index
      %c0_31 = arith.constant 0 : index
      %48 = vector.load %arg4[%c0_30, %c0_31] : memref<1x128xf32, #tpu.memory_space<vmem>>, vector<1x128xf32>
      tpu.vector_store %arg4[%c0_30, %c0_31], %47 {strides = array<i32>} : memref<1x128xf32, #tpu.memory_space<vmem>>, vector<1x128xf32>,
      %c0_32 = arith.constant 0 : index
      %c0_33 = arith.constant 0 : index
      %49 = vector.load %arg8[%c0_32, %c0_33] : memref<8x128xf32, #tpu.memory_space<vmem>>, vector<8x128xf32>
      %cst_34 = arith.constant dense<0.000000e+00> : vector<128xf32>
      %50 = vector.multi_reduction <add>, %49, %cst_34 [0] : vector<8x128xf32> to vector<128xf32>
      %51 = vector.shape_cast %50 : vector<128xf32> to vector<1x128xf32>
      %c0_35 = arith.constant 0 : index
      %c0_36 = arith.constant 0 : index
      %52 = vector.load %arg5[%c0_35, %c0_36] : memref<1x128xf32, #tpu.memory_space<vmem>>, vector<1x128xf32>
      tpu.vector_store %arg5[%c0_35, %c0_36], %51 {strides = array<i32>} : memref<1x128xf32, #tpu.memory_space<vmem>>, vector<1x128xf32>,
    } else {
    }
    return
  }
  func.func @transform_0(%arg0: i32, %arg1: i32) -> (i32, i32) {
    %c0_i32 = arith.constant 0 : i32
    return %arg1, %arg0 : i32, i32
  }
  func.func @transform_1(%arg0: i32, %arg1: i32) -> (i32, i32) {
    %c0_i32 = arith.constant 0 : i32
    return %arg1, %arg0 : i32, i32
  }
  func.func @transform_2(%arg0: i32, %arg1: i32) -> (i32, i32) {
    %c0_i32 = arith.constant 0 : i32
    %c0_i32_0 = arith.constant 0 : i32
    return %c0_i32, %arg0 : i32, i32
  }
  func.func @transform_3(%arg0: i32, %arg1: i32) -> (i32, i32) {
    %c0_i32 = arith.constant 0 : i32
    %c0_i32_0 = arith.constant 0 : i32
    return %c0_i32, %arg0 : i32, i32
  }
}

</mosaic_0001>

<llo_original>
// kernel: tpu_custom_call.1
$region0: #{tpu_custom_call.1}
  #allocation0 [shape = 'u32[]', space=smem, size = 0x4, offset = 0x4, fixed_abs, tag = 'smem constant byte address 0x4 - core index']
  #allocation1 [shape = 'u32[144,128]{1,0:T(1,128)}', space=vmem, size = 0x12000, scoped, tag = 'internal scratch']
  #allocation2 [shape = 'f32[8,128]{1,0:T(8,128)}', space=vmem, size = 0x1000, scoped, tag = 'scratch operand']
  #allocation3 [shape = 'f32[8,128]{1,0:T(8,128)}', space=vmem, size = 0x1000, scoped, tag = 'scratch operand']
  #allocation4 [shape = 'f32[8,128]{1,0:T(8,128)}', space=vmem, size = 0x1000, scoped, tag = 'scratch operand']
  %s0 = inlined_call_operand.hbm [shape: f32[256,384], index: 0, kind: input, shape index: {}]
  %s1 = inlined_call_operand.hbm [shape: s8[256,384], index: 1, kind: input, shape index: {}]
  %s2 = inlined_call_operand.hbm [shape: f32[1,384], index: 2, kind: output, shape index: {0}]
  %s3 = inlined_call_operand.hbm [shape: f32[1,384], index: 3, kind: output, shape index: {1}]
  %4 = xla_tuple %s2, %s3
  %s5 = sld [smem:[#allocation0]]
  $region65: #{tpu_custom_call.1} parent=0
    _
  %s7 = ssub.s32 1, %s5
  %s8 = scalar_select 0, %s7, %s5
  $region1: #{tpu_custom_call.1} parent=0
    #allocation5 [shape = 'u8[65536]{0}', space=vmem, size = 0x10000, scoped, tag = 'input window, operand 0']
    #allocation6 [shape = 's32[2]{0}', space=sflag, size = 0x8, scoped, tag = 'scoped memory for tpu_custom_call.1']
    #allocation7 [shape = 's32[2]{0}', space=sflag, size = 0x8, scoped, tag = 'scoped memory for tpu_custom_call.1']
    #allocation8 [shape = 'u8[16384]{0}', space=vmem, size = 0x4000, scoped, tag = 'input window, operand 1']
    #allocation9 [shape = 's32[2]{0}', space=sflag, size = 0x8, scoped, tag = 'scoped memory for tpu_custom_call.1']
    #allocation10 [shape = 'u8[1024]{0}', space=vmem, size = 0x400, scoped, tag = 'output window, operand 0']
    #allocation11 [shape = 'u8[1024]{0}', space=vmem, size = 0x400, scoped, tag = 'output window, operand 1']
    #allocation12 [shape = 's32[2]{0}', space=sflag, size = 0x8, scoped, tag = 'scoped memory for tpu_custom_call.1']
    %9 = vsyncpa [#allocation6], 0
    %s10 = scalar_lea.sflag [#allocation6], 1
    %11 = vsyncpa %s10, 0
    %12 = vsyncpa [#allocation9], 0
    %s13 = scalar_lea.sflag [#allocation9], 1
    %14 = vsyncpa %s13, 0
    %15 = vsyncpa [#allocation7], 0
    %s16 = scalar_lea.sflag [#allocation7], 1
    %17 = vsyncpa %s16, 0
    %18 = vsyncpa [#allocation12], 0
    %s19 = scalar_lea.sflag [#allocation12], 1
    %20 = vsyncpa %s19, 0
    loop: start=0, step=1, limit=14
    $region2: #{tpu_custom_call.1} parent=1 // loop_pre_header
      _
    $region3: #{tpu_custom_call.1} parent=1 // loop_header
      %s22 = sphi 0, %s26
      %p23 = scmp.ge.s32.totalorder %s22, 14
      %s29 = sphi 0, %s41
      %s30 = sphi 0, %s37
      %s31 = sphi 0, %s29
      %s32 = sphi 0, %s30
      %s33 = sphi 0, %s31
      %s34 = sphi 0, %s32
      %s46 = sphi 0, %s48
      %s49 = sphi 0, %s46
      %s50 = sphi 0, %s49
      %s66 = sphi 0, %s50
      %s74 = sphi 0, %s76
      %s77 = sphi 0, %s74
      %s78 = sphi 0, %s77
      %s94 = sphi 0, %s78
      %s100 = sphi 0, %s102
      %s103 = sphi 0, %s100
      %s104 = sphi 0, %s103
      %s120 = sphi 0, %s104
      %s126 = sphi 0, %s128
      %s129 = sphi 0, %s126
      %s130 = sphi 0, %s129
      %s146 = sphi 0, %s130
    $region4: #{tpu_custom_call.1} parent=1 // loop_header_branch
      %25 = sbr.rel (%p23) target = $region8
    $region5: #{tpu_custom_call.1} parent=1 // loop_body
      %s27 = ssub.s32 %s22, 1
      %s28 = ssub.s32 %s22, 2
      %s35 = sadd.s32 1, %s30
      %p36 = scmp.ge.s32.totalorder %s35, 4
      %s37 = scalar_select %p36, 0, %s35
      %s38 = sadd.s32 1, %s29
      %s39 = scalar_select %p36, %s38, %s29
      %p40 = scmp.ge.s32.totalorder %s39, 3
      %s41 = scalar_select %p40, 0, %s39
      %s42 = ssub.s32 %s30, %s37
      %s43 = ssub.s32 %s29, %s41
      %s44 = sor.u32 %s42, %s43
      %p45 = scmp.eq.s32.totalorder %s44, 0
      %s47 = sadd.s32 %s46, 1
      %s48 = scalar_select %p45, %s46, %s47
      %p51 = pneg %p45
      %p52 = scmp.eq.s32.totalorder %s22, 11
      %p53 = por %p51, %p52
      %p54 = scmp.ne.s32.totalorder %s46, %s49
      %p55 = scmp.eq.s32.totalorder %s22, 0
      %p56 = por %p54, %p55
      %p57 = scmp.ne.s32.totalorder %s46, %s49
      %p58 = scmp.eq.s32.totalorder %s27, 11
      %p59 = por %p57, %p58
      %p60 = scmp.ne.s32.totalorder %s49, %s50
      %p61 = scmp.eq.s32.totalorder %s27, 0
      %p62 = por %p60, %p61
      %p63 = scmp.ne.s32.totalorder %s49, %s50
      %p64 = scmp.eq.s32.totalorder %s28, 11
      %p65 = por %p63, %p64
      %p67 = scmp.ne.s32.totalorder %s50, %s66
      %p68 = scmp.eq.s32.totalorder %s28, 0
      %p69 = por %p67, %p68
      %s70 = ssub.s32 %s30, %s37
      %s71 = ssub.s32 %s29, %s41
      %s72 = sor.u32 %s70, %s71
      %p73 = scmp.eq.s32.totalorder %s72, 0
      %s75 = sadd.s32 %s74, 1
      %s76 = scalar_select %p73, %s74, %s75
      %p79 = pneg %p73
      %p80 = scmp.eq.s32.totalorder %s22, 11
      %p81 = por %p79, %p80
      %p82 = scmp.ne.s32.totalorder %s74, %s77
      %p83 = scmp.eq.s32.totalorder %s22, 0
      %p84 = por %p82, %p83
      %p85 = scmp.ne.s32.totalorder %s74, %s77
      %p86 = scmp.eq.s32.totalorder %s27, 11
      %p87 = por %p85, %p86
      %p88 = scmp.ne.s32.totalorder %s77, %s78
      %p89 = scmp.eq.s32.totalorder %s27, 0
      %p90 = por %p88, %p89
      %p91 = scmp.ne.s32.totalorder %s77, %s78
      %p92 = scmp.eq.s32.totalorder %s28, 11
      %p93 = por %p91, %p92
      %p95 = scmp.ne.s32.totalorder %s78, %s94
      %p96 = scmp.eq.s32.totalorder %s28, 0
      %p97 = por %p95, %p96
      %s98 = ssub.s32 %s29, %s41
      %p99 = scmp.eq.s32.totalorder %s98, 0
      %s101 = sadd.s32 %s100, 1
      %s102 = scalar_select %p99, %s100, %s101
      %p105 = pneg %p99
      %p106 = scmp.eq.s32.totalorder %s22, 11
      %p107 = por %p105, %p106
      %p108 = scmp.ne.s32.totalorder %s100, %s103
      %p109 = scmp.eq.s32.totalorder %s22, 0
      %p110 = por %p108, %p109
      %p111 = scmp.ne.s32.totalorder %s100, %s103
      %p112 = scmp.eq.s32.totalorder %s27, 11
      %p113 = por %p111, %p112
      %p114 = scmp.ne.s32.totalorder %s103, %s104
      %p115 = scmp.eq.s32.totalorder %s27, 0
      %p116 = por %p114, %p115
      %p117 = scmp.ne.s32.totalorder %s103, %s104
      %p118 = scmp.eq.s32.totalorder %s28, 11
      %p119 = por %p117, %p118
      %p121 = scmp.ne.s32.totalorder %s104, %s120
      %p122 = scmp.eq.s32.totalorder %s28, 0
      %p123 = por %p121, %p122
      %s124 = ssub.s32 %s29, %s41
      %p125 = scmp.eq.s32.totalorder %s124, 0
      %s127 = sadd.s32 %s126, 1
      %s128 = scalar_select %p125, %s126, %s127
      %p131 = pneg %p125
      %p132 = scmp.eq.s32.totalorder %s22, 11
      %p133 = por %p131, %p132
      %p134 = scmp.ne.s32.totalorder %s126, %s129
      %p135 = scmp.eq.s32.totalorder %s22, 0
      %p136 = por %p134, %p135
      %p137 = scmp.ne.s32.totalorder %s126, %s129
      %p138 = scmp.eq.s32.totalorder %s27, 11
      %p139 = por %p137, %p138
      %p140 = scmp.ne.s32.totalorder %s129, %s130
      %p141 = scmp.eq.s32.totalorder %s27, 0
      %p142 = por %p140, %p141
      %p143 = scmp.ne.s32.totalorder %s129, %s130
      %p144 = scmp.eq.s32.totalorder %s28, 11
      %p145 = por %p143, %p144
      %p147 = scmp.ne.s32.totalorder %s130, %s146
      %p148 = scmp.eq.s32.totalorder %s28, 0
      %p149 = por %p147, %p148
      %p150 = scmp.le.s32.totalorder 1, %s22
      %p151 = scmp.lt.s32.totalorder %s22, 13
      %p152 = pnand %p150, %p151
      %p153 = pneg %p152
      // Predicated region
      $region9: #{tpu_custom_call.1} parent=5 // pred_check
        _
      $region10: #{tpu_custom_call.1} parent=5 // pred_check_branch
        %155 = sbr.rel (%p152) target = $region12
      $region11: #{tpu_custom_call.1} parent=5 // pred_region
        %s156 = ssub.s32 %s22, 1
      $region12: #{tpu_custom_call.1} parent=5 // pred_fallthru
        _
      %p157 = scmp.lt.s32.totalorder %s22, 12
      // Predicated region
      $region13: #{tpu_custom_call.1} parent=5 // pred_check
        %p158 = pneg %p157
      $region14: #{tpu_custom_call.1} parent=5 // pred_check_branch
        %160 = sbr.rel (%p158) target = $region16
      $region15: #{tpu_custom_call.1} parent=5 // pred_region
        // Predicated region
        $region17: #{tpu_custom_call.1} parent=15 // pred_check
          %p161 = pneg %p56
        $region18: #{tpu_custom_call.1} parent=15 // pred_check_branch
          %163 = sbr.rel (%p161) target = $region20
        $region19: #{tpu_custom_call.1} parent=15 // pred_region
          %s164 = sand.u32 %s46, 1
          %s165 = scalar_lea.sflag [#allocation6], %s164
          %s166 = sand.u32 %s46, 1
          %s167 = smul.addr %s166, 64
          %s168 = scalar_lea.vmem [#allocation5], %s167
          %s169 = smul.u32 8, %s30
          %s171 = ssub.s32 1024, 1024
          %172 = vsyncadd %s165, %s171
          %s173 = smul.addr %s169, 3
          %s174 = sadd.s32 %s29, %s173
          %s175 = smul.addr %s174, 128
          %s176 = scalar_lea.hbm %s0, %s175
          %s177 = sshll.u32 %s168, 4
          %s178 = int_to_ptr.vmem [resolvable:$true] %s177
          %183 = dma.hbm_to_vmem [thread:$0]  %s176, 1024, %s178, %s165, 384, 128, 8
        $region20: #{tpu_custom_call.1} parent=15 // pred_fallthru
          _
        // Predicated region
        $region21: #{tpu_custom_call.1} parent=15 // pred_check
          %p184 = pneg %p84
        $region22: #{tpu_custom_call.1} parent=15 // pred_check_branch
          %186 = sbr.rel (%p184) target = $region24
        $region23: #{tpu_custom_call.1} parent=15 // pred_region
          %s187 = sand.u32 %s74, 1
          %s188 = scalar_lea.sflag [#allocation9], %s187
          %s189 = sand.u32 %s74, 1
          %s190 = smul.addr %s189, 16
          %s191 = scalar_lea.vmem [#allocation8], %s190
          %s192 = smul.u32 2, %s30
          %s194 = ssub.s32 256, 256
          %195 = vsyncadd %s188, %s194
          %s196 = smul.addr %s192, 3
          %s197 = sadd.s32 %s29, %s196
          %s198 = smul.addr %s197, 128
          %s199 = scalar_lea.hbm %s1, %s198
          %s200 = sshll.u32 %s191, 4
          %s201 = int_to_ptr.vmem [resolvable:$true] %s200
          %206 = dma.hbm_to_vmem [thread:$0]  %s199, 256, %s201, %s188, 384, 128, 8
        $region24: #{tpu_custom_call.1} parent=15 // pred_fallthru
          _
      $region16: #{tpu_custom_call.1} parent=5 // pred_fallthru
        _
      %p207 = scmp.le.s32.totalorder 1, %s22
      %p208 = scmp.lt.s32.totalorder %s22, 13
      %p209 = pnand %p207, %p208
      %p210 = pneg %p209
      // Predicated region
      $region25: #{tpu_custom_call.1} parent=5 // pred_check
        _
      $region26: #{tpu_custom_call.1} parent=5 // pred_check_branch
        %212 = sbr.rel (%p209) target = $region28
      $region27: #{tpu_custom_call.1} parent=5 // pred_region
        %s213 = ssub.s32 %s22, 1
        %s214 = sand.u32 %s49, 1
        %s215 = scalar_lea.sflag [#allocation6], %s214
        %s216 = sand.u32 %s49, 1
        %s217 = smul.addr %s216, 64
        %s218 = scalar_lea.vmem [#allocation5], %s217
        // Predicated region
        $region29: #{tpu_custom_call.1} parent=27 // pred_check
          %p219 = pneg %p62
        $region30: #{tpu_custom_call.1} parent=27 // pred_check_branch
          %221 = sbr.rel (%p219) target = $region32
        $region31: #{tpu_custom_call.1} parent=27 // pred_region
          %222 = dma.done %s215, 1024
        $region32: #{tpu_custom_call.1} parent=27 // pred_fallthru
          _
        %s223 = sand.u32 %s77, 1
        %s224 = scalar_lea.sflag [#allocation9], %s223
        %s225 = sand.u32 %s77, 1
        %s226 = smul.addr %s225, 16
        %s227 = scalar_lea.vmem [#allocation8], %s226
        // Predicated region
        $region33: #{tpu_custom_call.1} parent=27 // pred_check
          %p228 = pneg %p90
        $region34: #{tpu_custom_call.1} parent=27 // pred_check_branch
          %230 = sbr.rel (%p228) target = $region36
        $region35: #{tpu_custom_call.1} parent=27 // pred_region
          %231 = dma.done %s224, 256
        $region36: #{tpu_custom_call.1} parent=27 // pred_fallthru
          _
        %s232 = sand.u32 %s49, 1
        %s233 = scalar_lea.sflag [#allocation6], %s232
        %s234 = sand.u32 %s49, 1
        %s235 = smul.addr %s234, 64
        %s236 = scalar_lea.vmem [#allocation5], %s235
        %p237 = pneg %p62
        %p238 = pneg %p59
        %s239 = sand.u32 %s77, 1
        %s240 = scalar_lea.sflag [#allocation9], %s239
        %s241 = sand.u32 %s77, 1
        %s242 = smul.addr %s241, 16
        %s243 = scalar_lea.vmem [#allocation8], %s242
        %p244 = pneg %p90
        %p245 = pneg %p87
        %p246 = pneg %p116
        %p247 = pneg %p113
        %s248 = sand.u32 %s103, 1
        %s249 = scalar_lea.sflag [#allocation7], %s248
        %s250 = sand.u32 %s103, 1
        %s251 = scalar_lea.vmem [#allocation10], %s250
        %p252 = pneg %p142
        %p253 = pneg %p139
        %s254 = sand.u32 %s129, 1
        %s255 = scalar_lea.sflag [#allocation12], %s254
        %s256 = sand.u32 %s129, 1
        %s257 = scalar_lea.vmem [#allocation11], %s256
        %s258 = smul.u32 8, %s32
        %s259 = smul.u32 2, %s32
        %p260 = scmp.eq.s32.totalorder %s32, 0
        // Predicated region
        $region37: #{tpu_custom_call.1} parent=27 // pred_check
          %p261 = pneg %p260
        $region38: #{tpu_custom_call.1} parent=27 // pred_check_branch
          %263 = sbr.rel (%p261) target = $region40
        $region39: #{tpu_custom_call.1} parent=27 // pred_region
          %264 = vst [vmem:[#allocation2] sm:$0xff] -inf
          %265 = vst [vmem:[#allocation3] sm:$0xff] 0.0
          %266 = vst [vmem:[#allocation4] sm:$0xff] 0.0
        $region40: #{tpu_custom_call.1} parent=27 // pred_fallthru
          _
        %v267 = vld [vmem:[%s218] sm:$0xff]
        %v268 = vld [vmem:[%s218 + $0x8] sm:$0xff]
        %v269 = vld [vmem:[%s218 + $0x10] sm:$0xff]
        %v270 = vld [vmem:[%s218 + $0x18] sm:$0xff]
        %v271 = vld [vmem:[%s218 + $0x20] sm:$0xff]
        %v272 = vld [vmem:[%s218 + $0x28] sm:$0xff]
        %v273 = vld [vmem:[%s218 + $0x30] sm:$0xff]
        %v274 = vld [vmem:[%s218 + $0x38] sm:$0xff]
        %v275 = vmul.f32 %v267, 5.0
        %v276 = vmul.f32 %v268, 5.0
        %v277 = vmul.f32 %v269, 5.0
        %v278 = vmul.f32 %v270, 5.0
        %v279 = vmul.f32 %v271, 5.0
        %v280 = vmul.f32 %v272, 5.0
        %v281 = vmul.f32 %v273, 5.0
        %v282 = vmul.f32 %v274, 5.0
        %v283 = vld [vmem:[%s227] sm:$0xff]
        %v284 = vld [vmem:[%s227 + $0x8] sm:$0xff]
        %v285 = vunpack.c.0.s8 %v283
        %v286 = vunpack.c.1.s8 %v283
        %v287 = vunpack.c.2.s8 %v283
        %v288 = vunpack.c.3.s8 %v283
        %v289 = vunpack.c.0.s8 %v284
        %v290 = vunpack.c.1.s8 %v284
        %v291 = vunpack.c.2.s8 %v284
        %v292 = vunpack.c.3.s8 %v284
        %v293 = vcvt.s32.f32 %v285
        %v294 = vcvt.s32.f32 %v286
        %v295 = vcvt.s32.f32 %v287
        %v296 = vcvt.s32.f32 %v288
        %v297 = vcvt.s32.f32 %v289
        %v298 = vcvt.s32.f32 %v290
        %v299 = vcvt.s32.f32 %v291
        %v300 = vcvt.s32.f32 %v292
        %v301 = vmul.f32 %v275, %v293
        %v302 = vmul.f32 %v276, %v294
        %v303 = vmul.f32 %v277, %v295
        %v304 = vmul.f32 %v278, %v296
        %v305 = vmul.f32 %v279, %v297
        %v306 = vmul.f32 %v280, %v298
        %v307 = vmul.f32 %v281, %v299
        %v308 = vmul.f32 %v282, %v300
        %v309 = vsub.f32 %v275, %v301
        %v310 = vsub.f32 %v276, %v302
        %v311 = vsub.f32 %v277, %v303
        %v312 = vsub.f32 %v278, %v304
        %v313 = vsub.f32 %v279, %v305
        %v314 = vsub.f32 %v280, %v306
        %v315 = vsub.f32 %v281, %v307
        %v316 = vsub.f32 %v282, %v308
        %v317 = vmax.f32 %v309, %v313
        %v318 = vmax.f32 %v310, %v314
        %v319 = vmax.f32 %v311, %v315
        %v320 = vmax.f32 %v312, %v316
        %v321 = vmax.f32 %v317, %v318
        %v322 = vmax.f32 %v319, %v320
        %v323 = vmax.f32 %v321, %v322
        %v324 = vld [vmem:[#allocation2] sm:$0xff]
        %v325 = vmax.f32 %v324, %v323
        %v326 = vld [vmem:[#allocation3] sm:$0xff]
        %v327 = vsub.f32 %v324, %v325
        %v328 = vmul.f32 %v327, 1.442695
        %v329 = vpow.pop %v328
        %v330 = vmul.f32 %v326, %v329
        %v331 = vsub.f32 %v309, %v325
        %v332 = vsub.f32 %v310, %v325
        %v333 = vsub.f32 %v311, %v325
        %v334 = vsub.f32 %v312, %v325
        %v335 = vsub.f32 %v313, %v325
        %v336 = vsub.f32 %v314, %v325
        %v337 = vsub.f32 %v315, %v325
        %v338 = vsub.f32 %v316, %v325
        %v339 = vmul.f32 %v331, 1.442695
        %v340 = vpow.pop %v339
        %v341 = vmul.f32 %v332, 1.442695
        %v342 = vpow.pop %v341
        %v343 = vmul.f32 %v333, 1.442695
        %v344 = vpow.pop %v343
        %v345 = vmul.f32 %v334, 1.442695
        %v346 = vpow.pop %v345
        %v347 = vmul.f32 %v335, 1.442695
        %v348 = vpow.pop %v347
        %v349 = vmul.f32 %v336, 1.442695
        %v350 = vpow.pop %v349
        %v351 = vmul.f32 %v337, 1.442695
        %v352 = vpow.pop %v351
        %v353 = vmul.f32 %v338, 1.442695
        %v354 = vpow.pop %v353
        %v355 = vadd.f32 %v340, %v342
        %v356 = vadd.f32 %v355, %v344
        %v357 = vadd.f32 %v356, %v346
        %v358 = vadd.f32 %v357, %v348
        %v359 = vadd.f32 %v358, %v350
        %v360 = vadd.f32 %v359, %v352
        %v361 = vadd.f32 %v360, %v354
        %v362 = vadd.f32 %v330, %v361
        %363 = vst [vmem:[#allocation3] sm:$0xff] %v362
        %364 = vst [vmem:[#allocation2] sm:$0xff] %v325
        %v365 = vld [vmem:[#allocation4] sm:$0xff]
        %v366 = vadd.f32 %v301, %v302
        %v367 = vadd.f32 %v366, %v303
        %v368 = vadd.f32 %v367, %v304
        %v369 = vadd.f32 %v368, %v305
        %v370 = vadd.f32 %v369, %v306
        %v371 = vadd.f32 %v370, %v307
        %v372 = vadd.f32 %v371, %v308
        %v373 = vadd.f32 %v365, %v372
        %374 = vst [vmem:[#allocation4] sm:$0xff] %v373
        %p375 = scmp.eq.s32.totalorder %s32, 3
        // Predicated region
        $region41: #{tpu_custom_call.1} parent=27 // pred_check
          %p376 = pneg %p375
        $region42: #{tpu_custom_call.1} parent=27 // pred_check_branch
          %378 = sbr.rel (%p376) target = $region44
        $region43: #{tpu_custom_call.1} parent=27 // pred_region
          %v379 = vld [vmem:[#allocation2] sm:$0xff]
          %v380 = vrot.slane %v379, 4
          %v381 = vmax.f32 %v379, %v380
          %v382 = vrot.slane %v381, 2
          %v383 = vmax.f32 %v381, %v382
          %v384 = vrot.slane %v383, 1
          %v385 = vmax.f32 %v383, %v384
          %v386 = vld [vmem:[#allocation3] sm:$0xff]
          %v387 = vsub.f32 %v379, %v385
          %v388 = vmul.f32 %v387, 1.442695
          %v389 = vpow.pop %v388
          %v390 = vmul.f32 %v386, %v389
          %v391 = vrot.slane %v390, 4
          %v392 = vadd.f32 %v390, %v391
          %v393 = vrot.slane %v392, 2
          %v394 = vadd.f32 %v392, %v393
          %v395 = vrot.slane %v394, 1
          %v396 = vadd.f32 %v394, %v395
          %v397 = vlog2.pop %v396
          %v398 = vmul.f32 %v397, 0.6931472
          %v399 = vadd.f32 %v385, %v398
          %400 = vst [vmem:[%s251] sm:$0x1] %v399
          %v401 = vld [vmem:[#allocation4] sm:$0xff]
          %v402 = vrot.slane %v401, 4
          %v403 = vadd.f32 %v401, %v402
          %v404 = vrot.slane %v403, 2
          %v405 = vadd.f32 %v403, %v404
          %v406 = vrot.slane %v405, 1
          %v407 = vadd.f32 %v405, %v406
          %408 = vst [vmem:[%s257] sm:$0x1] %v407
        $region44: #{tpu_custom_call.1} parent=27 // pred_fallthru
          _
        %s409 = sand.u32 %s103, 1
        %s410 = scalar_lea.sflag [#allocation7], %s409
        %s411 = sand.u32 %s103, 1
        %s412 = scalar_lea.vmem [#allocation10], %s411
        %s413 = sand.u32 %s129, 1
        %s414 = scalar_lea.sflag [#allocation12], %s413
        %s415 = sand.u32 %s129, 1
        %s416 = scalar_lea.vmem [#allocation11], %s415
        // Predicated region
        $region45: #{tpu_custom_call.1} parent=27 // pred_check
          %p417 = pneg %p113
        $region46: #{tpu_custom_call.1} parent=27 // pred_check_branch
          %419 = sbr.rel (%p417) target = $region48
        $region47: #{tpu_custom_call.1} parent=27 // pred_region
          %s421 = ssub.s32 16, 16
          %422 = vsyncadd %s410, %s421
          %s423 = smul.addr %s31, 16
          %s424 = scalar_lea.hbm %s2, %s423
          %s426 = sshll.u32 %s412, 4
          %s427 = int_to_ptr.vmem [resolvable:$true] %s426
          %429 = dma.vmem_to_hbm [thread:$0]  %s427, 16, %s424, %s410
        $region48: #{tpu_custom_call.1} parent=27 // pred_fallthru
          _
        // Predicated region
        $region49: #{tpu_custom_call.1} parent=27 // pred_check
          %p430 = pneg %p139
        $region50: #{tpu_custom_call.1} parent=27 // pred_check_branch
          %432 = sbr.rel (%p430) target = $region52
        $region51: #{tpu_custom_call.1} parent=27 // pred_region
          %s434 = ssub.s32 16, 16
          %435 = vsyncadd %s414, %s434
          %s436 = smul.addr %s31, 16
          %s437 = scalar_lea.hbm %s3, %s436
          %s439 = sshll.u32 %s416, 4
          %s440 = int_to_ptr.vmem [resolvable:$true] %s439
          %442 = dma.vmem_to_hbm [thread:$0]  %s440, 16, %s437, %s414
        $region52: #{tpu_custom_call.1} parent=27 // pred_fallthru
          _
      $region28: #{tpu_custom_call.1} parent=5 // pred_fallthru
        _
      %p443 = scmp.le.s32.totalorder 2, %s22
      // Predicated region
      $region53: #{tpu_custom_call.1} parent=5 // pred_check
        %p444 = pneg %p443
      $region54: #{tpu_custom_call.1} parent=5 // pred_check_branch
        %446 = sbr.rel (%p444) target = $region56
      $region55: #{tpu_custom_call.1} parent=5 // pred_region
        %s447 = ssub.s32 %s22, 2
        // Predicated region
        $region57: #{tpu_custom_call.1} parent=55 // pred_check
          %p448 = pneg %p119
        $region58: #{tpu_custom_call.1} parent=55 // pred_check_branch
          %450 = sbr.rel (%p448) target = $region60
        $region59: #{tpu_custom_call.1} parent=55 // pred_region
          %s451 = sand.u32 %s104, 1
          %s452 = scalar_lea.sflag [#allocation7], %s451
          %s453 = sand.u32 %s104, 1
          %s454 = scalar_lea.vmem [#allocation10], %s453
          %455 = dma.done %s452, 16
        $region60: #{tpu_custom_call.1} parent=55 // pred_fallthru
          _
        // Predicated region
        $region61: #{tpu_custom_call.1} parent=55 // pred_check
          %p456 = pneg %p145
        $region62: #{tpu_custom_call.1} parent=55 // pred_check_branch
          %458 = sbr.rel (%p456) target = $region64
        $region63: #{tpu_custom_call.1} parent=55 // pred_region
          %s459 = sand.u32 %s130, 1
          %s460 = scalar_lea.sflag [#allocation12], %s459
          %s461 = sand.u32 %s130, 1
          %s462 = scalar_lea.vmem [#allocation11], %s461
          %463 = dma.done %s460, 16
        $region64: #{tpu_custom_call.1} parent=55 // pred_fallthru
          _
      $region56: #{tpu_custom_call.1} parent=5 // pred_fallthru
        _
    $region6: #{tpu_custom_call.1} parent=1 // loop_footer
      %s26 = sadd.s32 1, %s22
    $region7: #{tpu_custom_call.1} parent=1 // loop_footer_branch
      %21 = sbr.rel target = $region3
    $region8: #{tpu_custom_call.1} parent=1 // loop_exit
      _
    %464 = vsyncpa [#allocation6], 1
    %s465 = scalar_lea.sflag [#allocation6], 1
    %466 = vsyncpa %s465, 1
    %467 = vsyncpa [#allocation9], 1
    %s468 = scalar_lea.sflag [#allocation9], 1
    %469 = vsyncpa %s468, 1
    %470 = vsyncpa [#allocation7], 1
    %s471 = scalar_lea.sflag [#allocation7], 1
    %472 = vsyncpa %s471, 1
    %473 = vsyncpa [#allocation12], 1
    %s474 = scalar_lea.sflag [#allocation12], 1
    %475 = vsyncpa %s474, 1

</llo_original>
